<compile_context>
chip_gen: v7x
topology: tpu7x:2x2x1
jax: 0.10.0
libtpu: 0.0.40
codegen_flags: <defaults>
</compile_context>

<pallas_src>
import math

import jax
import jax.numpy as jnp
from jax import lax
from jax.experimental import pallas as pl
from jax.experimental.pallas import tpu as pltpu


def _round_up(x, m):
    return ((x + m - 1) // m) * m


def encoder_kernel(xc_ref, wf_ref, bf_ref, w2_ref, b2_ref, o_ref):
    # xc_ref: (TM, cink) bf16 tile of flattened (B*T_out) rows (unpadded feature dim).
    # Fused (conv1d ∘ Linear1) matmul, f32 accumulation; bias/ReLU stay f32
    # (v5e has no bf16 VPU).
    h1 = jnp.dot(xc_ref[...], wf_ref[...],
                 preferred_element_type=jnp.float32) + bf_ref[...]
    h1 = jnp.maximum(h1, 0.0)

    out = jnp.dot(h1.astype(jnp.bfloat16), w2_ref[...],
                  preferred_element_type=jnp.float32) + b2_ref[...]

    # tanh on the EUP in f32, then lane-dense bf16 store (out_p is a multiple of 128).
    o_ref[...] = jnp.tanh(out).astype(o_ref.dtype)


def _to_cols(x, kernel_size, stride, dtype):
    """x: (B, C, T) -> (B*T_out, C*K), matching torch Conv1d (O, I, K) weight flattening.

    Single host pass; bf16 cast fused with the layout change.
    """
    B, C, T = x.shape
    t_out = (T - kernel_size) // stride + 1
    if stride == kernel_size:
        # Non-overlapping windows: pure reshape, no gather, no HBM duplication.
        cols = x[:, :, : t_out * kernel_size].reshape(B, C, t_out, kernel_size)
    else:
        # TODO(synk): for K > stride replace this gather im2col with K/stride shifted
        # in-kernel matmuls (reads x once instead of K/stride times).
        idx = jnp.arange(t_out)[:, None] * stride + jnp.arange(kernel_size)[None, :]
        cols = x[:, :, idx]                                   # (B, C, T_out, K)
    cols = jnp.transpose(cols, (0, 2, 1, 3)).astype(dtype)    # (B, T_out, C, K)
    return cols.reshape(B * t_out, C * kernel_size)


def spectral_boundary_encoder(x, params, *, kernel_size, stride, row_tile=1024):
    """x: (B, C_in, T) float32. Returns (B, T_out, out_dim) float32."""
    wc, bc, w1, b1, w2, b2 = params   # torch layouts: (latent, C*K), (hidden, latent), (out, hidden)
    B, C_in, T = x.shape
    latent, cink = wc.shape
    hidden = w1.shape[0]
    out_dim = w2.shape[0]
    t_out = (T - kernel_size) // stride + 1
    rows = B * t_out

    hid_p = _round_up(hidden, 128)
    out_p = _round_up(out_dim, 128)

    # Row tiling: large tiles amortize the ~0.35us per-grid-step overhead, but keep
    # >=2 grid steps so both v7x TensorCores get work under "parallel" semantics.
    tm = min(row_tile, _round_up(rows, 16))
    if rows > 16 and _round_up(rows, tm) // tm < 2:
        tm = _round_up(math.ceil(rows / 2), 16)
    rows_p = _round_up(rows, tm)
    n_tiles = rows_p // tm

    # ---- host-side prep -------------------------------------------------------
    # Algebraic fusion of conv1d with the first Linear (no nonlinearity between them).
    # Product / fused bias computed in f32, then cast once to bf16 for the MXU.
    wc_f = wc.astype(jnp.float32)
    w1_f = w1.astype(jnp.float32)
    w_fused = jnp.dot(wc_f.T, w1_f.T)                                        # (cink, hidden)
    b_fused = jnp.dot(bc.reshape(1, latent).astype(jnp.float32), w1_f.T) \
        + b1.reshape(1, hidden).astype(jnp.float32)                          # (1, hidden)

    wf = jnp.pad(w_fused, ((0, 0), (0, hid_p - hidden))).astype(jnp.bfloat16)
    bf = jnp.pad(b_fused, ((0, 0), (0, hid_p - hidden))).astype(jnp.float32)
    w2_t = jnp.pad(w2.T, ((0, hid_p - hidden), (0, out_p - out_dim))).astype(jnp.bfloat16)
    b2_p = jnp.pad(b2.reshape(1, out_dim),
                   ((0, 0), (0, out_p - out_dim))).astype(jnp.float32)

    # im2col in one pass; feature axis left unpadded (memory-bound kernel: only the
    # output store needs to be lane-dense, not the input loads).
    x_cols = _to_cols(x, kernel_size, stride, jnp.bfloat16)                  # (rows, cink)
    if rows_p != rows:
        x_cols = jnp.pad(x_cols, ((0, rows_p - rows), (0, 0)))

    cost = pl.CostEstimate(
        flops=2 * rows_p * (cink * hid_p + hid_p * out_p),
        transcendentals=rows_p * out_p,
        bytes_accessed=(rows_p * cink * 2                     # x (bf16)
                        + (wf.size + w2_t.size) * 2           # weights (bf16)
                        + (bf.size + b2_p.size) * 4           # biases (f32)
                        + rows_p * out_p * 2),                # output (bf16)
    )

    out_padded = pl.pallas_call(
        encoder_kernel,
        out_shape=jax.ShapeDtypeStruct((rows_p, out_p), jnp.bfloat16),
        grid_spec=pltpu.PrefetchScalarGridSpec(
            num_scalar_prefetch=0,
            grid=(n_tiles,),
            in_specs=[
                pl.BlockSpec((tm, cink), lambda i: (i, 0)),      # x row tile (full-extent feat dim)
                pl.BlockSpec((cink, hid_p), lambda i: (0, 0)),   # fused conv+W1 weight (resident)
                pl.BlockSpec((1, hid_p), lambda i: (0, 0)),      # fused bias
                pl.BlockSpec((hid_p, out_p), lambda i: (0, 0)),  # W2
                pl.BlockSpec((1, out_p), lambda i: (0, 0)),      # b2
            ],
            out_specs=pl.BlockSpec((tm, out_p), lambda i: (i, 0)),
        ),
        compiler_params=pltpu.CompilerParams(dimension_semantics=("parallel",)),
        cost_estimate=cost,
    )(x_cols, wf, bf, w2_t, b2_p)

    # De-pad (padded rows hold tanh(b2) garbage — must be sliced off) and cast the
    # small (rows, out_dim) result back to f32 to match the torch module's dtype.
    return out_padded[:rows, :out_dim].astype(jnp.float32).reshape(B, t_out, out_dim)


def reference(x, params, *, kernel_size, stride):
    wc, bc, w1, b1, w2, b2 = params
    latent = wc.shape[0]
    c_in = x.shape[1]
    wc3 = wc.reshape(latent, c_in, kernel_size)
    y = lax.conv_general_dilated(
        x, wc3, window_strides=(stride,), padding="VALID",
        dimension_numbers=("NCH", "OIH", "NCH"))
    y = y + bc.reshape(1, latent, 1)
    y = jnp.transpose(y, (0, 2, 1))                                  # (B, T_out, latent)
    y = jnp.maximum(jnp.einsum("btl,hl->bth", y, w1) + b1, 0.0)
    y = jnp.tanh(jnp.einsum("bth,oh->bto", y, w2) + b2)
    return y


if __name__ == "__main__":
    # Small deterministic config
    B, C_in, T = 2, 4, 64
    K, STRIDE = 4, 4
    LATENT, HIDDEN, OUT_DIM = 32, 32, 16

    key = jax.random.PRNGKey(0)
    kx, kwc, kbc, kw1, kb1, kw2, kb2 = jax.random.split(key, 7)

    x = jax.random.normal(kx, (B, C_in, T), dtype=jnp.float32)

    wc = 0.1 * jax.random.normal(kwc, (LATENT, C_in * K), dtype=jnp.float32)
    bc = 0.1 * jax.random.normal(kbc, (1, LATENT), dtype=jnp.float32)
    w1 = 0.1 * jax.random.normal(kw1, (HIDDEN, LATENT), dtype=jnp.float32)
    b1 = 0.1 * jax.random.normal(kb1, (1, HIDDEN), dtype=jnp.float32)
    w2 = 0.1 * jax.random.normal(kw2, (OUT_DIM, HIDDEN), dtype=jnp.float32)
    b2 = 0.1 * jax.random.normal(kb2, (1, OUT_DIM), dtype=jnp.float32)
    params = (wc, bc, w1, b1, w2, b2)

    out = spectral_boundary_encoder(x, params, kernel_size=K, stride=STRIDE)
    out = jax.block_until_ready(out)

    ref = reference(x, params, kernel_size=K, stride=STRIDE)
    t_out = (T - K) // STRIDE + 1
    assert out.shape == (B, t_out, OUT_DIM), out.shape
    # bf16 MXU operands + bf16 output store with f32 accumulation -> loosened tolerance.
    assert jnp.allclose(out, ref, atol=2e-2, rtol=2e-2), float(jnp.max(jnp.abs(out - ref)))

    print("KERNEL_OK")
</pallas_src>

<mosaic_0001>
module attributes {stable_mosaic.version = 11 : i64} {
  func.func @encoder_kernel(%arg0: i32, %arg1: memref<16x16xbf16, #tpu.memory_space<vmem>>, %arg2: memref<16x128xbf16, #tpu.memory_space<vmem>>, %arg3: memref<1x128xf32, #tpu.memory_space<vmem>>, %arg4: memref<128x128xbf16, #tpu.memory_space<vmem>>, %arg5: memref<1x128xf32, #tpu.memory_space<vmem>>, %arg6: memref<16x128xbf16, #tpu.memory_space<vmem>>) attributes {dimension_semantics = [#tpu.dimension_semantics<parallel>], iteration_bounds = array<i64: 2>, scalar_prefetch = 0 : i64, scratch_operands = 0 : i64, tpu.core_type = #tpu.core_type<tc>, window_params = [{transform_indices = @transform_0, window_bounds = array<i64: 16, 16>}, {pipeline_mode = #tpu.pipeline_mode<synchronous>, transform_indices = @transform_1, window_bounds = array<i64: 16, 128>}, {pipeline_mode = #tpu.pipeline_mode<synchronous>, transform_indices = @transform_2, window_bounds = array<i64: 1, 128>}, {pipeline_mode = #tpu.pipeline_mode<synchronous>, transform_indices = @transform_3, window_bounds = array<i64: 128, 128>}, {pipeline_mode = #tpu.pipeline_mode<synchronous>, transform_indices = @transform_4, window_bounds = array<i64: 1, 128>}, {transform_indices = @transform_5, window_bounds = array<i64: 16, 128>}]} {
    %c0 = arith.constant 0 : index
    %c0_0 = arith.constant 0 : index
    %0 = vector.load %arg1[%c0, %c0_0] : memref<16x16xbf16, #tpu.memory_space<vmem>>, vector<16x16xbf16>
    %c0_1 = arith.constant 0 : index
    %c0_2 = arith.constant 0 : index
    %1 = vector.load %arg2[%c0_1, %c0_2] : memref<16x128xbf16, #tpu.memory_space<vmem>>, vector<16x128xbf16>
    %cst = arith.constant dense<0.000000e+00> : vector<16x128xf32>
    %2 = tpu.matmul %0, %1, %cst {dimension_numbers = #tpu.dot_dimension_numbers<[1], [0], [0], [1], [0, 0, 1, 1], [], []>} : vector<16x16xbf16>, vector<16x128xbf16>, vector<16x128xf32> -> vector<16x128xf32>
    %c0_3 = arith.constant 0 : index
    %c0_4 = arith.constant 0 : index
    %3 = vector.load %arg3[%c0_3, %c0_4] : memref<1x128xf32, #tpu.memory_space<vmem>>, vector<1x128xf32>
    %4 = vector.broadcast %3 : vector<1x128xf32> to vector<16x128xf32>
    %5 = arith.addf %2, %4 : vector<16x128xf32>
    %cst_5 = arith.constant 0.000000e+00 : f32
    %6 = vector.broadcast %cst_5 : f32 to vector<16x128xf32>
    %7 = arith.maximumf %5, %6 : vector<16x128xf32>
    %8 = arith.truncf %7 : vector<16x128xf32> to vector<16x128xbf16>
    %c0_6 = arith.constant 0 : index
    %c0_7 = arith.constant 0 : index
    %9 = vector.load %arg4[%c0_6, %c0_7] : memref<128x128xbf16, #tpu.memory_space<vmem>>, vector<128x128xbf16>
    %cst_8 = arith.constant dense<0.000000e+00> : vector<16x128xf32>
    %10 = tpu.matmul %8, %9, %cst_8 {dimension_numbers = #tpu.dot_dimension_numbers<[1], [0], [0], [1], [0, 0, 1, 1], [], []>} : vector<16x128xbf16>, vector<128x128xbf16>, vector<16x128xf32> -> vector<16x128xf32>
    %c0_9 = arith.constant 0 : index
    %c0_10 = arith.constant 0 : index
    %11 = vector.load %arg5[%c0_9, %c0_10] : memref<1x128xf32, #tpu.memory_space<vmem>>, vector<1x128xf32>
    %12 = vector.broadcast %11 : vector<1x128xf32> to vector<16x128xf32>
    %13 = arith.addf %10, %12 : vector<16x128xf32>
    %14 = math.tanh %13 : vector<16x128xf32>
    %15 = arith.truncf %14 : vector<16x128xf32> to vector<16x128xbf16>
    %c0_11 = arith.constant 0 : index
    %c0_12 = arith.constant 0 : index
    %16 = vector.load %arg6[%c0_11, %c0_12] : memref<16x128xbf16, #tpu.memory_space<vmem>>, vector<16x128xbf16>
    tpu.vector_store %arg6[%c0_11, %c0_12], %15 {strides = array<i32>} : memref<16x128xbf16, #tpu.memory_space<vmem>>, vector<16x128xbf16>,
    return
  }
  func.func @transform_0(%arg0: i32) -> (i32, i32) {
    %c0_i32 = arith.constant 0 : i32
    %c0_i32_0 = arith.constant 0 : i32
    return %arg0, %c0_i32 : i32, i32
  }
  func.func @transform_1(%arg0: i32) -> (i32, i32) {
    %c0_i32 = arith.constant 0 : i32
    %c0_i32_0 = arith.constant 0 : i32
    %c0_i32_1 = arith.constant 0 : i32
    return %c0_i32, %c0_i32_0 : i32, i32
  }
  func.func @transform_2(%arg0: i32) -> (i32, i32) {
    %c0_i32 = arith.constant 0 : i32
    %c0_i32_0 = arith.constant 0 : i32
    %c0_i32_1 = arith.constant 0 : i32
    return %c0_i32, %c0_i32_0 : i32, i32
  }
  func.func @transform_3(%arg0: i32) -> (i32, i32) {
    %c0_i32 = arith.constant 0 : i32
    %c0_i32_0 = arith.constant 0 : i32
    %c0_i32_1 = arith.constant 0 : i32
    return %c0_i32, %c0_i32_0 : i32, i32
  }
  func.func @transform_4(%arg0: i32) -> (i32, i32) {
    %c0_i32 = arith.constant 0 : i32
    %c0_i32_0 = arith.constant 0 : i32
    %c0_i32_1 = arith.constant 0 : i32
    return %c0_i32, %c0_i32_0 : i32, i32
  }
  func.func @transform_5(%arg0: i32) -> (i32, i32) {
    %c0_i32 = arith.constant 0 : i32
    %c0_i32_0 = arith.constant 0 : i32
    return %arg0, %c0_i32 : i32, i32
  }
}

</mosaic_0001>

<llo_original>
// kernel: tpu_custom_call.1
$region0: #{tpu_custom_call.1}
  #allocation0 [shape = 'u32[]', space=smem, size = 0x4, offset = 0x4, fixed_abs, tag = 'smem constant byte address 0x4 - core index']
  #allocation1 [shape = 'u32[144,128]{1,0:T(1,128)}', space=vmem, size = 0x12000, scoped, tag = 'internal scratch']
  %s0 = inlined_call_operand.vmem [shape: bf16[32,16], index: 0, kind: input, shape index: {}]
  %s1 = inlined_call_operand.vmem [shape: bf16[16,128], index: 1, kind: input, shape index: {}]
  %s2 = inlined_call_operand.vmem [shape: f32[1,128], index: 2, kind: input, shape index: {}]
  %s3 = inlined_call_operand.hbm [shape: bf16[128,128], index: 3, kind: input, shape index: {}]
  %s4 = inlined_call_operand.vmem [shape: f32[1,128], index: 4, kind: input, shape index: {}]
  %s5 = inlined_call_operand.hbm [shape: bf16[32,128], index: 5, kind: output, shape index: {}]
  %s6 = sld [smem:[#allocation0]]
  $region57: #{tpu_custom_call.1} parent=0
    _
  %s8 = ssub.s32 1, %s6
  %s9 = scalar_select 0, %s8, %s6
  $region1: #{tpu_custom_call.1} parent=0
    #allocation2 [shape = 'u8[32768]{0}', space=vmem, size = 0x8000, scoped, tag = 'input window, operand 3, single buffered']
    #allocation3 [shape = 's32[2]{0}', space=sflag, size = 0x8, scoped, tag = 'scoped memory for tpu_custom_call.1']
    #allocation4 [shape = 's32[2]{0}', space=sflag, size = 0x8, scoped, tag = 'scoped memory for tpu_custom_call.1']
    #allocation5 [shape = 'u8[8192]{0}', space=vmem, size = 0x2000, scoped, tag = 'output window, operand 0']
    %10 = vsyncpa [#allocation3], 0
    %11 = vsyncpa [#allocation4], 0
    %s12 = scalar_lea.sflag [#allocation4], 1
    %13 = vsyncpa %s12, 0
    loop: start=0, step=1, limit=4
    $region2: #{tpu_custom_call.1} parent=1 // loop_pre_header
      _
    $region3: #{tpu_custom_call.1} parent=1 // loop_header
      %s15 = sphi 0, %s19
      %p16 = scmp.ge.s32.totalorder %s15, 4
      %s25 = sphi 0, %s27
      %s28 = sphi 0, %s25
      %s29 = sphi 0, %s28
      %s45 = sphi 0, %s29
      %s49 = sphi 0, %s49
      %s51 = sphi 0, %s49
      %s52 = sphi 0, %s51
      %s66 = sphi 0, %s52
      %s70 = sphi 0, %s70
      %s72 = sphi 0, %s70
      %s73 = sphi 0, %s72
      %s87 = sphi 0, %s73
      %s91 = sphi 0, %s91
      %s93 = sphi 0, %s91
      %s94 = sphi 0, %s93
      %s108 = sphi 0, %s94
      %s112 = sphi 0, %s112
      %s114 = sphi 0, %s112
      %s115 = sphi 0, %s114
      %s129 = sphi 0, %s115
      %s135 = sphi 0, %s137
      %s138 = sphi 0, %s135
      %s139 = sphi 0, %s138
      %s155 = sphi 0, %s139
    $region4: #{tpu_custom_call.1} parent=1 // loop_header_branch
      %18 = sbr.rel (%p16) target = $region8
    $region5: #{tpu_custom_call.1} parent=1 // loop_body
      %s20 = ssub.s32 %s15, 1
      %s21 = ssub.s32 %s15, 2
      %s22 = sadd.s32 %s15, 1
      %s23 = ssub.s32 %s15, %s22
      %p24 = scmp.eq.s32.totalorder %s23, 0
      %s26 = sadd.s32 %s25, 1
      %s27 = scalar_select %p24, %s25, %s26
      %p30 = pneg %p24
      %p31 = scmp.eq.s32.totalorder %s15, 1
      %p32 = por %p30, %p31
      %p33 = scmp.ne.s32.totalorder %s25, %s28
      %p34 = scmp.eq.s32.totalorder %s15, 0
      %p35 = por %p33, %p34
      %p36 = scmp.ne.s32.totalorder %s25, %s28
      %p37 = scmp.eq.s32.totalorder %s20, 1
      %p38 = por %p36, %p37
      %p39 = scmp.ne.s32.totalorder %s28, %s29
      %p40 = scmp.eq.s32.totalorder %s20, 0
      %p41 = por %p39, %p40
      %p42 = scmp.ne.s32.totalorder %s28, %s29
      %p43 = scmp.eq.s32.totalorder %s21, 1
      %p44 = por %p42, %p43
      %p46 = scmp.ne.s32.totalorder %s29, %s45
      %p47 = scmp.eq.s32.totalorder %s21, 0
      %p48 = por %p46, %p47
      %s50 = sadd.s32 %s49, 1
      %p53 = scmp.eq.s32.totalorder %s15, 1
      %p54 = scmp.ne.s32.totalorder %s49, %s51
      %p55 = scmp.eq.s32.totalorder %s15, 0
      %p56 = por %p54, %p55
      %p57 = scmp.ne.s32.totalorder %s49, %s51
      %p58 = scmp.eq.s32.totalorder %s20, 1
      %p59 = por %p57, %p58
      %p60 = scmp.ne.s32.totalorder %s51, %s52
      %p61 = scmp.eq.s32.totalorder %s20, 0
      %p62 = por %p60, %p61
      %p63 = scmp.ne.s32.totalorder %s51, %s52
      %p64 = scmp.eq.s32.totalorder %s21, 1
      %p65 = por %p63, %p64
      %p67 = scmp.ne.s32.totalorder %s52, %s66
      %p68 = scmp.eq.s32.totalorder %s21, 0
      %p69 = por %p67, %p68
      %s71 = sadd.s32 %s70, 1
      %p74 = scmp.eq.s32.totalorder %s15, 1
      %p75 = scmp.ne.s32.totalorder %s70, %s72
      %p76 = scmp.eq.s32.totalorder %s15, 0
      %p77 = por %p75, %p76
      %p78 = scmp.ne.s32.totalorder %s70, %s72
      %p79 = scmp.eq.s32.totalorder %s20, 1
      %p80 = por %p78, %p79
      %p81 = scmp.ne.s32.totalorder %s72, %s73
      %p82 = scmp.eq.s32.totalorder %s20, 0
      %p83 = por %p81, %p82
      %p84 = scmp.ne.s32.totalorder %s72, %s73
      %p85 = scmp.eq.s32.totalorder %s21, 1
      %p86 = por %p84, %p85
      %p88 = scmp.ne.s32.totalorder %s73, %s87
      %p89 = scmp.eq.s32.totalorder %s21, 0
      %p90 = por %p88, %p89
      %s92 = sadd.s32 %s91, 1
      %p95 = scmp.eq.s32.totalorder %s15, 1
      %p96 = scmp.ne.s32.totalorder %s91, %s93
      %p97 = scmp.eq.s32.totalorder %s15, 0
      %p98 = por %p96, %p97
      %p99 = scmp.ne.s32.totalorder %s91, %s93
      %p100 = scmp.eq.s32.totalorder %s20, 1
      %p101 = por %p99, %p100
      %p102 = scmp.ne.s32.totalorder %s93, %s94
      %p103 = scmp.eq.s32.totalorder %s20, 0
      %p104 = por %p102, %p103
      %p105 = scmp.ne.s32.totalorder %s93, %s94
      %p106 = scmp.eq.s32.totalorder %s21, 1
      %p107 = por %p105, %p106
      %p109 = scmp.ne.s32.totalorder %s94, %s108
      %p110 = scmp.eq.s32.totalorder %s21, 0
      %p111 = por %p109, %p110
      %s113 = sadd.s32 %s112, 1
      %p116 = scmp.eq.s32.totalorder %s15, 1
      %p117 = scmp.ne.s32.totalorder %s112, %s114
      %p118 = scmp.eq.s32.totalorder %s15, 0
      %p119 = por %p117, %p118
      %p120 = scmp.ne.s32.totalorder %s112, %s114
      %p121 = scmp.eq.s32.totalorder %s20, 1
      %p122 = por %p120, %p121
      %p123 = scmp.ne.s32.totalorder %s114, %s115
      %p124 = scmp.eq.s32.totalorder %s20, 0
      %p125 = por %p123, %p124
      %p126 = scmp.ne.s32.totalorder %s114, %s115
      %p127 = scmp.eq.s32.totalorder %s21, 1
      %p128 = por %p126, %p127
      %p130 = scmp.ne.s32.totalorder %s115, %s129
      %p131 = scmp.eq.s32.totalorder %s21, 0
      %p132 = por %p130, %p131
      %s133 = ssub.s32 %s15, %s22
      %p134 = scmp.eq.s32.totalorder %s133, 0
      %s136 = sadd.s32 %s135, 1
      %s137 = scalar_select %p134, %s135, %s136
      %p140 = pneg %p134
      %p141 = scmp.eq.s32.totalorder %s15, 1
      %p142 = por %p140, %p141
      %p143 = scmp.ne.s32.totalorder %s135, %s138
      %p144 = scmp.eq.s32.totalorder %s15, 0
      %p145 = por %p143, %p144
      %p146 = scmp.ne.s32.totalorder %s135, %s138
      %p147 = scmp.eq.s32.totalorder %s20, 1
      %p148 = por %p146, %p147
      %p149 = scmp.ne.s32.totalorder %s138, %s139
      %p150 = scmp.eq.s32.totalorder %s20, 0
      %p151 = por %p149, %p150
      %p152 = scmp.ne.s32.totalorder %s138, %s139
      %p153 = scmp.eq.s32.totalorder %s21, 1
      %p154 = por %p152, %p153
      %p156 = scmp.ne.s32.totalorder %s139, %s155
      %p157 = scmp.eq.s32.totalorder %s21, 0
      %p158 = por %p156, %p157
      %p159 = scmp.le.s32.totalorder 1, %s15
      %p160 = scmp.lt.s32.totalorder %s15, 3
      %p161 = pnand %p159, %p160
      %p162 = pneg %p161
      // Predicated region
      $region9: #{tpu_custom_call.1} parent=5 // pred_check
        _
      $region10: #{tpu_custom_call.1} parent=5 // pred_check_branch
        %164 = sbr.rel (%p161) target = $region12
      $region11: #{tpu_custom_call.1} parent=5 // pred_region
        %s165 = ssub.s32 %s15, 1
        // Predicated region
        $region13: #{tpu_custom_call.1} parent=11 // pred_check
          %p166 = pneg %p62
        $region14: #{tpu_custom_call.1} parent=11 // pred_check_branch
          %168 = sbr.rel (%p166) target = $region16
        $region15: #{tpu_custom_call.1} parent=11 // pred_region
          _
        $region16: #{tpu_custom_call.1} parent=11 // pred_fallthru
          _
        // Predicated region
        $region17: #{tpu_custom_call.1} parent=11 // pred_check
          %p169 = pneg %p83
        $region18: #{tpu_custom_call.1} parent=11 // pred_check_branch
          %171 = sbr.rel (%p169) target = $region20
        $region19: #{tpu_custom_call.1} parent=11 // pred_region
          _
        $region20: #{tpu_custom_call.1} parent=11 // pred_fallthru
          _
        // Predicated region
        $region21: #{tpu_custom_call.1} parent=11 // pred_check
          %p172 = pneg %p104
        $region22: #{tpu_custom_call.1} parent=11 // pred_check_branch
          %174 = sbr.rel (%p172) target = $region24
        $region23: #{tpu_custom_call.1} parent=11 // pred_region
          %s176 = ssub.s32 1024, 1024
          %177 = vsyncadd [#allocation3], %s176
          %s178 = sshll.u32 [#allocation2], 4
          %s179 = int_to_ptr.vmem [resolvable:$true] %s178
          %184 = dma.hbm_to_vmem [thread:$0]  %s3, 1024, %s179, [#allocation3], 64, 64, 4
        $region24: #{tpu_custom_call.1} parent=11 // pred_fallthru
          _
        // Predicated region
        $region25: #{tpu_custom_call.1} parent=11 // pred_check
          %p185 = pneg %p125
        $region26: #{tpu_custom_call.1} parent=11 // pred_check_branch
          %187 = sbr.rel (%p185) target = $region28
        $region27: #{tpu_custom_call.1} parent=11 // pred_region
          _
        $region28: #{tpu_custom_call.1} parent=11 // pred_fallthru
          _
      $region12: #{tpu_custom_call.1} parent=5 // pred_fallthru
        _
      %p188 = scmp.lt.s32.totalorder %s15, 2
      // Predicated region
      $region29: #{tpu_custom_call.1} parent=5 // pred_check
        %p189 = pneg %p188
      $region30: #{tpu_custom_call.1} parent=5 // pred_check_branch
        %191 = sbr.rel (%p189) target = $region32
      $region31: #{tpu_custom_call.1} parent=5 // pred_region
        // Predicated region
        $region33: #{tpu_custom_call.1} parent=31 // pred_check
          %p192 = pneg %p35
        $region34: #{tpu_custom_call.1} parent=31 // pred_check_branch
          %194 = sbr.rel (%p192) target = $region36
        $region35: #{tpu_custom_call.1} parent=31 // pred_region
          %s195 = smul.u32 2, %s15
          %p196 = scmp.lt.s32.totalorder %s195, 3
          %s197 = scalar_select %p196, %s195, 3
          %s198 = smul.addr %s197, 4
          %s199 = scalar_lea.vmem %s0, %s198
          %s200 = smul.u32 2, %s15
        $region36: #{tpu_custom_call.1} parent=31 // pred_fallthru
          _
      $region32: #{tpu_custom_call.1} parent=5 // pred_fallthru
        _
      %p201 = scmp.le.s32.totalorder 1, %s15
      %p202 = scmp.lt.s32.totalorder %s15, 3
      %p203 = pnand %p201, %p202
      %p204 = pneg %p203
      // Predicated region
      $region37: #{tpu_custom_call.1} parent=5 // pred_check
        _
      $region38: #{tpu_custom_call.1} parent=5 // pred_check_branch
        %206 = sbr.rel (%p203) target = $region40
      $region39: #{tpu_custom_call.1} parent=5 // pred_region
        %s207 = ssub.s32 %s15, 1
        // Predicated region
        $region41: #{tpu_custom_call.1} parent=39 // pred_check
          %p208 = pneg %p104
        $region42: #{tpu_custom_call.1} parent=39 // pred_check_branch
          %210 = sbr.rel (%p208) target = $region44
        $region43: #{tpu_custom_call.1} parent=39 // pred_region
          %211 = dma.done [#allocation3], 1024
        $region44: #{tpu_custom_call.1} parent=39 // pred_fallthru
          _
        %s212 = smul.u32 2, %s20
        %p213 = scmp.lt.s32.totalorder %s212, 3
        %s214 = scalar_select %p213, %s212, 3
        %s215 = smul.addr %s214, 4
        %s216 = scalar_lea.vmem %s0, %s215
        %p217 = pneg %p41
        %p218 = pneg %p38
        %p219 = pneg %p62
        %p220 = pneg %p59
        %p221 = pneg %p83
        %p222 = pneg %p80
        %p223 = pneg %p104
        %p224 = pneg %p101
        %p225 = pneg %p125
        %p226 = pneg %p122
        %p227 = pneg %p151
        %p228 = pneg %p148
        %s229 = sand.u32 %s138, 1
        %s230 = scalar_lea.sflag [#allocation4], %s229
        %s231 = sand.u32 %s138, 1
        %s232 = smul.addr %s231, 8
        %s233 = scalar_lea.vmem [#allocation5], %s232
        %s234 = smul.u32 2, %s20
        %p235 = scmp.lt.s32.totalorder %s234, 3
        %s236 = scalar_select %p235, %s234, 3
        %s237 = smul.addr %s236, 4
        %s238 = scalar_lea.vmem %s0, %s237
        %s239 = smul.u32 2, %s20
        %s240 = smul.u32 2, %s20
        %v242 = vld [vmem:[%s238] sm:$0xf]
        %v243 = vld [vmem:[%s238 + $0x4] sm:$0xf]
        %v244 = vld [vmem:[%s1] sm:$0xf]
        %v245 = vld [vmem:[%s1 + $0x4] sm:$0xf]
        %v246 = vld [vmem:[%s2] sm:$0x1]
        %v248 = vlaneseq
        %v249 = vshrl.u32 %v248, 7
        %v250 = vsub.s32 0, %v249
        %v251 = vrot.slane %v246, %v250
        %v255 = vunpack.c.l.b16 %v242
        %v256 = vunpack.c.l.b16 %v243
        %v257 = vpack.c.b16 %v256, %v255
        %v260 = vunpack.c.l.b16 %v244
        %v261 = vunpack.c.l.b16 %v245
        %v262 = vpack.c.b16 %v261, %v260
        %vm264 = vcmask 130048
        %v266 = vsel %vm264, %v257, 0
        %268 = vmatprep.subr.bf16.mxu0 0
        %269 = vmatpush1.bf16.msra.mxu0 %v262
        %270 = vmatprep.subr.bf16.mxu0 0
        %271 = vmatpush1.bf16.msra.mxu0 0
        %272 = vmatprep.subr.bf16.mxu0 0
        %273 = vmatpush1.bf16.msra.mxu0 0
        %274 = vmatprep.subr.bf16.mxu0 0
        %275 = vmatpush1.bf16.msra.mxu0 0
        %276 = vmatprep.subr.bf16.mxu0 0
        %277 = vmatpush1.bf16.msra.mxu0 0
        %278 = vmatprep.subr.bf16.mxu0 0
        %279 = vmatpush1.bf16.msra.mxu0 0
        %280 = vmatprep.subr.bf16.mxu0 0
        %281 = vmatpush1.bf16.msra.mxu0 0
        %282 = vmatprep.subr.bf16.mxu0 0
        %283 = vmatpush1.bf16.msra.mxu0 0
        %284 = vmatprep.subr.bf16.mxu0 0
        %285 = vmatpush1.bf16.msra.mxu0 0
        %286 = vmatprep.subr.bf16.mxu0 0
        %287 = vmatpush1.bf16.msra.mxu0 0
        %288 = vmatprep.subr.bf16.mxu0 0
        %289 = vmatpush1.bf16.msra.mxu0 0
        %290 = vmatprep.subr.bf16.mxu0 0
        %291 = vmatpush1.bf16.msra.mxu0 0
        %292 = vmatprep.subr.bf16.mxu0 0
        %293 = vmatpush1.bf16.msra.mxu0 0
        %294 = vmatprep.subr.bf16.mxu0 0
        %295 = vmatpush1.bf16.msra.mxu0 0
        %296 = vmatprep.subr.bf16.mxu0 0
        %297 = vmatpush1.bf16.msra.mxu0 0
        %298 = vmatprep.subr.bf16.mxu0 0
        %299 = vmatpush1.bf16.msra.mxu0 0
        %300 = vmatprep.mubr.bf16.mxu0 0
        %301 = vmatmul.mubr.bf16.gmra.mrb[0].mxu0 %v266
        %v302 = vpop.f32.mrb[0].mxu0
        %v303 = vadd.f32 %v251, %v302
        %v304 = vpop.f32.mrb[0].mxu0
        %v305 = vpop.f32.mrb[0].mxu0
        %v306 = vadd.f32 %v251, %v305
        %v307 = vpop.f32.mrb[0].mxu0
        %308 = vdwg.mxu0
        %v309 = vmax.f32 %v303, 0.0
        %v310 = vmax.f32 %v306, 0.0
        %v311 = vpack.c.bf16 %v310, %v309
        %v312 = vld [vmem:[#allocation2] sm:$0xf]
        %v313 = vld [vmem:[#allocation2 + $0x4] sm:$0xf]
        %v314 = vld [vmem:[#allocation2 + $0x8] sm:$0xf]
        %v315 = vld [vmem:[#allocation2 + $0xc] sm:$0xf]
        %v316 = vld [vmem:[#allocation2 + $0x10] sm:$0xf]
        %v317 = vld [vmem:[#allocation2 + $0x14] sm:$0xf]
        %v318 = vld [vmem:[#allocation2 + $0x18] sm:$0xf]
        %v319 = vld [vmem:[#allocation2 + $0x1c] sm:$0xf]
        %v320 = vld [vmem:[#allocation2 + $0x20] sm:$0xf]
        %v321 = vld [vmem:[#allocation2 + $0x24] sm:$0xf]
        %v322 = vld [vmem:[#allocation2 + $0x28] sm:$0xf]
        %v323 = vld [vmem:[#allocation2 + $0x2c] sm:$0xf]
        %v324 = vld [vmem:[#allocation2 + $0x30] sm:$0xf]
        %v325 = vld [vmem:[#allocation2 + $0x34] sm:$0xf]
        %v326 = vld [vmem:[#allocation2 + $0x38] sm:$0xf]
        %v327 = vld [vmem:[#allocation2 + $0x3c] sm:$0xf]
        %v328 = vld [vmem:[%s4] sm:$0x1]
        %v330 = vlaneseq
        %v331 = vshrl.u32 %v330, 7
        %v332 = vsub.s32 0, %v331
        %v333 = vrot.slane %v328, %v332
        %v351 = vunpack.c.l.b16 %v312
        %v352 = vunpack.c.l.b16 %v313
        %v353 = vunpack.c.l.b16 %v314
        %v354 = vunpack.c.l.b16 %v315
        %v355 = vunpack.c.l.b16 %v316
        %v356 = vunpack.c.l.b16 %v317
        %v357 = vunpack.c.l.b16 %v318
        %v358 = vunpack.c.l.b16 %v319
        %v359 = vunpack.c.l.b16 %v320
        %v360 = vunpack.c.l.b16 %v321
        %v361 = vunpack.c.l.b16 %v322
        %v362 = vunpack.c.l.b16 %v323
        %v363 = vunpack.c.l.b16 %v324
        %v364 = vunpack.c.l.b16 %v325
        %v365 = vunpack.c.l.b16 %v326
        %v366 = vunpack.c.l.b16 %v327
        %v367 = vpack.c.b16 %v352, %v351
        %v368 = vpack.c.b16 %v354, %v353
        %v369 = vpack.c.b16 %v356, %v355
        %v370 = vpack.c.b16 %v358, %v357
        %v371 = vpack.c.b16 %v360, %v359
        %v372 = vpack.c.b16 %v362, %v361
        %v373 = vpack.c.b16 %v364, %v363
        %v374 = vpack.c.b16 %v366, %v365
        %383 = vmatprep.subr.bf16.mxu0 0
        %384 = vmatpush1.bf16.msra.mxu0 %v367
        %385 = vmatprep.subr.bf16.mxu0 0
        %386 = vmatpush1.bf16.msra.mxu0 %v368
        %387 = vmatprep.subr.bf16.mxu0 0
        %388 = vmatpush1.bf16.msra.mxu0 %v369
        %389 = vmatprep.subr.bf16.mxu0 0
        %390 = vmatpush1.bf16.msra.mxu0 %v370
        %391 = vmatprep.subr.bf16.mxu0 0
        %392 = vmatpush1.bf16.msra.mxu0 %v371
        %393 = vmatprep.subr.bf16.mxu0 0
        %394 = vmatpush1.bf16.msra.mxu0 %v372
        %395 = vmatprep.subr.bf16.mxu0 0
        %396 = vmatpush1.bf16.msra.mxu0 %v373
        %397 = vmatprep.subr.bf16.mxu0 0
        %398 = vmatpush1.bf16.msra.mxu0 %v374
        %399 = vmatprep.subr.bf16.mxu0 0
        %400 = vmatpush1.bf16.msra.mxu0 0
        %401 = vmatprep.subr.bf16.mxu0 0
        %402 = vmatpush1.bf16.msra.mxu0 0
        %403 = vmatprep.subr.bf16.mxu0 0
        %404 = vmatpush1.bf16.msra.mxu0 0
        %405 = vmatprep.subr.bf16.mxu0 0
        %406 = vmatpush1.bf16.msra.mxu0 0
        %407 = vmatprep.subr.bf16.mxu0 0
        %408 = vmatpush1.bf16.msra.mxu0 0
        %409 = vmatprep.subr.bf16.mxu0 0
        %410 = vmatpush1.bf16.msra.mxu0 0
        %411 = vmatprep.subr.bf16.mxu0 0
        %412 = vmatpush1.bf16.msra.mxu0 0
        %413 = vmatprep.subr.bf16.mxu0 0
        %414 = vmatpush1.bf16.msra.mxu0 0
        %415 = vmatprep.mubr.bf16.mxu0 0
        %416 = vmatmul.mubr.bf16.gmra.mrb[0].mxu0 %v311
        %v417 = vpop.f32.mrb[0].mxu0
        %v418 = vadd.f32 %v333, %v417
        %v419 = vpop.f32.mrb[0].mxu0
        %v420 = vpop.f32.mrb[0].mxu0
        %v421 = vadd.f32 %v333, %v420
        %v422 = vpop.f32.mrb[0].mxu0
        %423 = vdwg.mxu0
        %v424 = vtanh.pop %v418
        %v425 = vtanh.pop %v421
        %v426 = vpack.c.bf16 %v425, %v424
        %v428 = vunpack.c.l.b16 %v426
        %v429 = vunpack.c.h.b16 %v426
        %v430 = vpack.c.b16 %v428, %v428
        %v431 = vpack.c.b16 %v429, %v429
        %434 = vst [vmem:[%s233] sm:$0xf] %v430
        %435 = vst [vmem:[%s233 + $0x4] sm:$0xf] %v431
        %s436 = sand.u32 %s138, 1
        %s437 = scalar_lea.sflag [#allocation4], %s436
        %s438 = sand.u32 %s138, 1
        %s439 = smul.addr %s438, 8
        %s440 = scalar_lea.vmem [#allocation5], %s439
        // Predicated region
        $region45: #{tpu_custom_call.1} parent=39 // pred_check
          %p441 = pneg %p148
        $region46: #{tpu_custom_call.1} parent=39 // pred_check_branch
          %443 = sbr.rel (%p441) target = $region48
        $region47: #{tpu_custom_call.1} parent=39 // pred_region
          %s444 = smul.u32 2, %s20
          %s446 = ssub.s32 128, 128
          %447 = vsyncadd %s437, %s446
          %s448 = smul.addr %s444, 64
          %s449 = scalar_lea.hbm %s5, %s448
          %s450 = sshll.u32 %s440, 4
          %s451 = int_to_ptr.vmem [resolvable:$true] %s450
          %456 = dma.vmem_to_hbm [thread:$0]  %s451, 128, %s449, %s437, 64, 64, 4
        $region48: #{tpu_custom_call.1} parent=39 // pred_fallthru
          _
      $region40: #{tpu_custom_call.1} parent=5 // pred_fallthru
        _
      %p457 = scmp.le.s32.totalorder 2, %s15
      // Predicated region
      $region49: #{tpu_custom_call.1} parent=5 // pred_check
        %p458 = pneg %p457
      $region50: #{tpu_custom_call.1} parent=5 // pred_check_branch
        %460 = sbr.rel (%p458) target = $region52
      $region51: #{tpu_custom_call.1} parent=5 // pred_region
        %s461 = ssub.s32 %s15, 2
        // Predicated region
        $region53: #{tpu_custom_call.1} parent=51 // pred_check
          %p462 = pneg %p154
        $region54: #{tpu_custom_call.1} parent=51 // pred_check_branch
          %464 = sbr.rel (%p462) target = $region56
        $region55: #{tpu_custom_call.1} parent=51 // pred_region
          %s465 = sand.u32 %s139, 1
          %s466 = scalar_lea.sflag [#allocation4], %s465
          %s467 = sand.u32 %s139, 1
          %s468 = smul.addr %s467, 8
          %s469 = scalar_lea.vmem [#allocation5], %s468
          %470 = dma.done %s466, 128
        $region56: #{tpu_custom_call.1} parent=51 // pred_fallthru
          _
      $region52: #{tpu_custom_call.1} parent=5 // pred_fallthru
        _
    $region6: #{tpu_custom_call.1} parent=1 // loop_footer
      %s19 = sadd.s32 1, %s15
    $region7: #{tpu_custom_call.1} parent=1 // loop_footer_branch
      %14 = sbr.rel target = $region3
    $region8: #{tpu_custom_call.1} parent=1 // loop_exit
      _
    %471 = vsyncpa [#allocation3], 1
    %s472 = scalar_lea.sflag [#allocation3], 1
    %473 = vsyncpa %s472, 1
    %474 = vsyncpa [#allocation4], 1
    %s475 = scalar_lea.sflag [#allocation4], 1
    %476 = vsyncpa %s475, 1

</llo_original>
